<compile_context>
chip_gen: v6e
topology: v6e:2x2x1
jax: 0.10.0
libtpu: 0.0.40
codegen_flags: <defaults>
</compile_context>

<pallas_src>
import functools

import jax
import jax.numpy as jnp
import numpy as np
from jax import lax
from jax.experimental import pallas as pl
from jax.experimental.pallas import tpu as pltpu


# ----------------------------------------------------------------------------
# Tiled linear:  o = x @ w + b
# grid = (M//tm, Nout//tn, K//tk), f32 VMEM accumulator, bias + store at last k
# ----------------------------------------------------------------------------
def _linear_kernel(x_ref, w_ref, b_ref, o_ref, acc_ref):
    k = pl.program_id(2)

    @pl.when(k == 0)
    def _():
        acc_ref[...] = jnp.zeros_like(acc_ref)

    acc_ref[...] += jnp.dot(x_ref[...], w_ref[...],
                            preferred_element_type=jnp.float32)

    @pl.when(k == pl.num_programs(2) - 1)
    def _():
        o_ref[...] = (acc_ref[...] + b_ref[...]).astype(o_ref.dtype)


def _pick_tile(dim, target, align):
    """Largest tile <= target that divides dim and is a multiple of `align`.
    Falls back to the full dim (always a legal block size)."""
    if dim <= target:
        return dim
    t = (target // align) * align
    while t >= align:
        if dim % t == 0:
            return t
        t -= align
    return dim


def _linear(x2d, w, b, *, tm_target=256, tk_target=512, tn_target=256):
    """x2d: (M, K), w: (K, Nout), b: (Nout,) -> (M, Nout)."""
    M, K = x2d.shape
    Kw, Nout = w.shape
    assert K == Kw
    tm = _pick_tile(M, tm_target, 8)
    tk = _pick_tile(K, tk_target, 128)
    tn = _pick_tile(Nout, tn_target, 128)
    grid = (M // tm, Nout // tn, K // tk)
    return pl.pallas_call(
        _linear_kernel,
        out_shape=jax.ShapeDtypeStruct((M, Nout), x2d.dtype),
        grid=grid,
        in_specs=[
            pl.BlockSpec((tm, tk), lambda i, j, k: (i, k)),
            pl.BlockSpec((tk, tn), lambda i, j, k: (k, j)),
            pl.BlockSpec((1, tn), lambda i, j, k: (0, j)),
        ],
        out_specs=pl.BlockSpec((tm, tn), lambda i, j, k: (i, j)),
        scratch_shapes=[pltpu.VMEM((tm, tn), jnp.float32)],
        compiler_params=pltpu.CompilerParams(
            dimension_semantics=("parallel", "parallel", "arbitrary")),
    )(x2d, w, b.reshape(1, Nout))


# ----------------------------------------------------------------------------
# Fused RoPE + multi-head attention.
# One batch element per grid step: qkv block (1, N, 3C) -> output block (1, N, C).
# All heads are processed inside the kernel so the output store is lane-dense.
# ----------------------------------------------------------------------------
def _attn_kernel(*refs, num_heads, head_dim, scale, use_rope):
    if use_rope:
        qkv_ref, cos_ref, sin_ref, perm_ref, o_ref = refs
    else:
        qkv_ref, o_ref = refs

    C = num_heads * head_dim
    qkv = qkv_ref[0]                                    # (N, 3C)
    q = qkv[:, :C].astype(jnp.float32)
    k = qkv[:, C:2 * C].astype(jnp.float32)
    v = qkv[:, 2 * C:].astype(jnp.float32)

    if use_rope:
        cos = cos_ref[...]                              # (N, C), CLS row = 1
        sin = sin_ref[...]                              # (N, C), sign-folded, CLS row = 0
        perm = perm_ref[...]                            # (C, C) even/odd pair-swap
        # x*cos + rot(x)*sin, with rot(x) = pair_swap(x) * sign folded into `sin`.
        q = q * cos + jnp.dot(q, perm, preferred_element_type=jnp.float32) * sin
        k = k * cos + jnp.dot(k, perm, preferred_element_type=jnp.float32) * sin

    q = q * scale                                       # single f32 scale per block

    # TODO(synk): for large N / large head_dim, add a KV grid axis with online
    # softmax (flash-style) and head-batched >=256-wide MXU tiles; at these
    # sizes the full (N, N) scores per head fit trivially in VMEM.
    outs = []
    for h in range(num_heads):
        lo = h * head_dim
        hi = lo + head_dim
        qh, kh, vh = q[:, lo:hi], k[:, lo:hi], v[:, lo:hi]
        s = lax.dot_general(qh, kh, (((1,), (1,)), ((), ())),
                            preferred_element_type=jnp.float32)     # (N, N) f32
        m = jnp.max(s, axis=-1, keepdims=True)
        p = jnp.exp(s - m)
        denom = jnp.sum(p, axis=-1, keepdims=True)
        p = p * pl.reciprocal(denom, approx=True)
        outs.append(jnp.dot(p, vh, preferred_element_type=jnp.float32))

    o_ref[0] = jnp.concatenate(outs, axis=-1).astype(o_ref.dtype)   # lane-dense store


def _fused_rope_attention(qkv3, rope_tables, num_heads, head_dim, scale, out_dtype):
    B, N, threeC = qkv3.shape
    C = num_heads * head_dim
    use_rope = rope_tables is not None
    kernel = functools.partial(_attn_kernel, num_heads=num_heads,
                               head_dim=head_dim, scale=scale, use_rope=use_rope)

    in_specs = [pl.BlockSpec((1, N, threeC), lambda b: (b, 0, 0))]
    args = [qkv3]
    if use_rope:
        cos_full, sin_full, perm = rope_tables
        in_specs += [
            pl.BlockSpec((N, C), lambda b: (0, 0)),
            pl.BlockSpec((N, C), lambda b: (0, 0)),
            pl.BlockSpec((C, C), lambda b: (0, 0)),
        ]
        args += [cos_full, sin_full, perm]

    return pl.pallas_call(
        kernel,
        out_shape=jax.ShapeDtypeStruct((B, N, C), out_dtype),
        grid=(B,),
        in_specs=in_specs,
        out_specs=pl.BlockSpec((1, N, C), lambda b: (b, 0, 0)),
        compiler_params=pltpu.CompilerParams(dimension_semantics=("parallel",)),
    )(*args)


# ----------------------------------------------------------------------------
# RoPE tables (tiny host-side precompute on the (N, head_dim) table only).
# The CLS row is padded with (sin=0, cos=1) so the kernel applies RoPE to all
# N tokens with no concatenation; the rotation's sign pattern is folded into
# the sin table, and the pair swap is a constant permutation matrix.
# ----------------------------------------------------------------------------
def _build_rope_tables(rope, num_heads, head_dim):
    sin_emb, cos_emb = jnp.split(rope.astype(jnp.float32), 2, axis=-1)   # (N-1, hd)
    sign = jnp.tile(jnp.asarray([-1.0, 1.0], dtype=jnp.float32), head_dim // 2)
    sin_signed = sin_emb * sign
    cos_full = jnp.concatenate(
        [jnp.ones((1, head_dim), jnp.float32), cos_emb], axis=0)         # (N, hd)
    sin_full = jnp.concatenate(
        [jnp.zeros((1, head_dim), jnp.float32), sin_signed], axis=0)     # (N, hd)
    cos_full = jnp.tile(cos_full, (1, num_heads))                        # (N, C)
    sin_full = jnp.tile(sin_full, (1, num_heads))                        # (N, C)
    C = num_heads * head_dim
    sigma = np.arange(C) ^ 1                                             # swap even/odd pairs
    perm = jnp.asarray(np.eye(C, dtype=np.float32)[sigma])               # (C, C)
    return cos_full, sin_full, perm


# ----------------------------------------------------------------------------
# Full forward (no XLA transposes between pallas_calls)
# ----------------------------------------------------------------------------
def attention_with_rope_forward(x, params, rope=None, num_heads=4):
    B, N, C = x.shape
    hd = C // num_heads
    scale = hd ** (-0.5)

    qkv = _linear(x.reshape(B * N, C), params["qkv_w"], params["qkv_b"])
    qkv = qkv.reshape(B, N, 3 * C)        # layout-preserving reshape only

    # q_norm / k_norm are Identity (qk_norm=False default)
    tables = _build_rope_tables(rope, num_heads, hd) if rope is not None else None
    o = _fused_rope_attention(qkv, tables, num_heads, hd, scale, x.dtype)  # (B, N, C)

    o = _linear(o.reshape(B * N, C), params["proj_w"], params["proj_b"])
    return o.reshape(B, N, C)


# ----------------------------------------------------------------------------
# Pure-JAX reference for correctness checking (mirrors the PyTorch module)
# ----------------------------------------------------------------------------
def apply_rot_embed_cat(x, emb):
    # x: (..., L, hd); emb: (L, 2*hd) = concat([sin, cos], -1)
    sin_emb, cos_emb = jnp.split(emb, 2, axis=-1)
    x_even = x[..., ::2]
    x_odd = x[..., 1::2]
    rot_x = jnp.stack([-x_odd, x_even], axis=-1).reshape(x.shape)
    return x * cos_emb + rot_x * sin_emb


def reference_forward(x, params, rope, num_heads):
    B, N, C = x.shape
    hd = C // num_heads
    scale = hd ** (-0.5)
    qkv = x.reshape(B * N, C) @ params["qkv_w"] + params["qkv_b"]
    qkv = qkv.reshape(B, N, 3, num_heads, hd).transpose(2, 0, 3, 1, 4)
    q, k, v = qkv[0], qkv[1], qkv[2]
    if rope is not None:
        q = jnp.concatenate(
            [q[:, :, :1], apply_rot_embed_cat(q[:, :, 1:], rope)], axis=2)
        k = jnp.concatenate(
            [k[:, :, :1], apply_rot_embed_cat(k[:, :, 1:], rope)], axis=2)
    attn = jax.nn.softmax((q * scale) @ jnp.swapaxes(k, -2, -1), axis=-1)
    o = attn @ v
    o = o.transpose(0, 2, 1, 3).reshape(B * N, C)
    o = o @ params["proj_w"] + params["proj_b"]
    return o.reshape(B, N, C)


if __name__ == "__main__":
    B, N, C, num_heads = 2, 8, 32, 4
    hd = C // num_heads

    key = jax.random.PRNGKey(0)
    kx, kq, kp, kb = jax.random.split(key, 4)

    x = jax.random.normal(kx, (B, N, C), dtype=jnp.float32)

    params = {
        # qkv_bias=False in the module default -> zero bias
        "qkv_w": 0.02 * jax.random.normal(kq, (C, 3 * C), dtype=jnp.float32),
        "qkv_b": jnp.zeros((3 * C,), dtype=jnp.float32),
        "proj_w": 0.02 * jax.random.normal(kp, (C, C), dtype=jnp.float32),
        "proj_b": 0.01 * jax.random.normal(kb, (C,), dtype=jnp.float32),
    }

    # Rotary embedding table for the N-1 non-CLS tokens: concat([sin, cos], -1)
    pos = jnp.arange(N - 1, dtype=jnp.float32)
    bands = 1.0 / (10000.0 ** (jnp.arange(hd // 2, dtype=jnp.float32) / (hd // 2)))
    angles = pos[:, None] * bands[None, :]                 # (N-1, hd//2)
    sin = jnp.repeat(jnp.sin(angles), 2, axis=-1)          # (N-1, hd)
    cos = jnp.repeat(jnp.cos(angles), 2, axis=-1)          # (N-1, hd)
    rope = jnp.concatenate([sin, cos], axis=-1)            # (N-1, 2*hd)

    out = attention_with_rope_forward(x, params, rope=rope, num_heads=num_heads)
    out = jax.block_until_ready(out)

    ref = reference_forward(x, params, rope, num_heads)
    # Slightly looser tolerance than exact-divide softmax: pl.reciprocal(approx=True)
    np.testing.assert_allclose(np.asarray(out), np.asarray(ref), rtol=1e-3, atol=1e-4)

    # TODO(synk): dropout (attn_drop / proj_drop) omitted — p=0.0 default makes it a no-op.
    print("KERNEL_OK")
</pallas_src>

<mosaic_0001>
module attributes {stable_mosaic.version = 11 : i64} {
  func.func @_linear_kernel(%arg0: i32, %arg1: i32, %arg2: i32, %arg3: memref<16x32xf32, #tpu.memory_space<vmem>>, %arg4: memref<32x96xf32, #tpu.memory_space<vmem>>, %arg5: memref<1x96xf32, #tpu.memory_space<vmem>>, %arg6: memref<16x96xf32, #tpu.memory_space<vmem>>, %arg7: memref<16x96xf32, #tpu.memory_space<vmem>>) attributes {dimension_semantics = [#tpu.dimension_semantics<parallel>, #tpu.dimension_semantics<parallel>, #tpu.dimension_semantics<arbitrary>], iteration_bounds = array<i64: 1, 1, 1>, scalar_prefetch = 0 : i64, scratch_operands = 1 : i64, tpu.core_type = #tpu.core_type<tc>, window_params = [{transform_indices = @transform_0, window_bounds = array<i64: 16, 32>}, {transform_indices = @transform_1, window_bounds = array<i64: 32, 96>}, {transform_indices = @transform_2, window_bounds = array<i64: 1, 96>}, {transform_indices = @transform_3, window_bounds = array<i64: 16, 96>}]} {
    %c0_i32 = arith.constant 0 : i32
    %0 = arith.cmpi eq, %arg2, %c0_i32 : i32
    %1 = arith.extui %0 : i1 to i32
    %c0_i32_0 = arith.constant 0 : i32
    %2 = arith.cmpi ne, %1, %c0_i32_0 : i32
    scf.if %2 {
      %cst_10 = arith.constant 0.000000e+00 : f32
      %12 = vector.broadcast %cst_10 : f32 to vector<16x96xf32>
      %c0_11 = arith.constant 0 : index
      %c0_12 = arith.constant 0 : index
      %13 = vector.load %arg7[%c0_11, %c0_12] : memref<16x96xf32, #tpu.memory_space<vmem>>, vector<16x96xf32>
      tpu.vector_store %arg7[%c0_11, %c0_12], %12 {strides = array<i32>} : memref<16x96xf32, #tpu.memory_space<vmem>>, vector<16x96xf32>,
    } else {
    }
    %c0 = arith.constant 0 : index
    %c0_1 = arith.constant 0 : index
    %3 = vector.load %arg7[%c0, %c0_1] : memref<16x96xf32, #tpu.memory_space<vmem>>, vector<16x96xf32>
    %c0_2 = arith.constant 0 : index
    %c0_3 = arith.constant 0 : index
    %4 = vector.load %arg3[%c0_2, %c0_3] : memref<16x32xf32, #tpu.memory_space<vmem>>, vector<16x32xf32>
    %c0_4 = arith.constant 0 : index
    %c0_5 = arith.constant 0 : index
    %5 = vector.load %arg4[%c0_4, %c0_5] : memref<32x96xf32, #tpu.memory_space<vmem>>, vector<32x96xf32>
    %cst = arith.constant dense<0.000000e+00> : vector<16x96xf32>
    %6 = tpu.matmul %4, %5, %cst {dimension_numbers = #tpu.dot_dimension_numbers<[1], [0], [0], [1], [0, 0, 1, 1], [], []>} : vector<16x32xf32>, vector<32x96xf32>, vector<16x96xf32> -> vector<16x96xf32>
    %7 = arith.addf %3, %6 : vector<16x96xf32>
    %c0_6 = arith.constant 0 : index
    %c0_7 = arith.constant 0 : index
    %8 = vector.load %arg7[%c0_6, %c0_7] : memref<16x96xf32, #tpu.memory_space<vmem>>, vector<16x96xf32>
    tpu.vector_store %arg7[%c0_6, %c0_7], %7 {strides = array<i32>} : memref<16x96xf32, #tpu.memory_space<vmem>>, vector<16x96xf32>,
    %c0_i32_8 = arith.constant 0 : i32
    %9 = arith.cmpi eq, %arg2, %c0_i32_8 : i32
    %10 = arith.extui %9 : i1 to i32
    %c0_i32_9 = arith.constant 0 : i32
    %11 = arith.cmpi ne, %10, %c0_i32_9 : i32
    scf.if %11 {
      %c0_10 = arith.constant 0 : index
      %c0_11 = arith.constant 0 : index
      %12 = vector.load %arg7[%c0_10, %c0_11] : memref<16x96xf32, #tpu.memory_space<vmem>>, vector<16x96xf32>
      %c0_12 = arith.constant 0 : index
      %c0_13 = arith.constant 0 : index
      %13 = vector.load %arg5[%c0_12, %c0_13] : memref<1x96xf32, #tpu.memory_space<vmem>>, vector<1x96xf32>
      %14 = vector.broadcast %13 : vector<1x96xf32> to vector<16x96xf32>
      %15 = arith.addf %12, %14 : vector<16x96xf32>
      %c0_14 = arith.constant 0 : index
      %c0_15 = arith.constant 0 : index
      %16 = vector.load %arg6[%c0_14, %c0_15] : memref<16x96xf32, #tpu.memory_space<vmem>>, vector<16x96xf32>
      tpu.vector_store %arg6[%c0_14, %c0_15], %15 {strides = array<i32>} : memref<16x96xf32, #tpu.memory_space<vmem>>, vector<16x96xf32>,
    } else {
    }
    return
  }
  func.func @transform_0(%arg0: i32, %arg1: i32, %arg2: i32) -> (i32, i32) {
    %c0_i32 = arith.constant 0 : i32
    return %arg0, %arg2 : i32, i32
  }
  func.func @transform_1(%arg0: i32, %arg1: i32, %arg2: i32) -> (i32, i32) {
    %c0_i32 = arith.constant 0 : i32
    return %arg2, %arg1 : i32, i32
  }
  func.func @transform_2(%arg0: i32, %arg1: i32, %arg2: i32) -> (i32, i32) {
    %c0_i32 = arith.constant 0 : i32
    %c0_i32_0 = arith.constant 0 : i32
    return %c0_i32, %arg1 : i32, i32
  }
  func.func @transform_3(%arg0: i32, %arg1: i32, %arg2: i32) -> (i32, i32) {
    %c0_i32 = arith.constant 0 : i32
    return %arg0, %arg1 : i32, i32
  }
}

</mosaic_0001>

<llo_original>
// kernel: tpu_custom_call.1
$region0: #{tpu_custom_call.1}
  #allocation0 [shape = 'u32[]', space=smem, size = 0x4, offset = 0x4, fixed_abs, tag = 'smem constant byte address 0x4 - core index']
  #allocation1 [shape = 'u32[144,128]{1,0:T(1,128)}', space=vmem, size = 0x12000, scoped, tag = 'internal scratch']
  #allocation2 [shape = 'f32[16,96]{1,0:T(8,128)}', space=vmem, size = 0x2000, scoped, tag = 'scratch operand']
  %s0 = inlined_call_operand.hbm [shape: f32[16,32], index: 0, kind: input, shape index: {}]
  %s1 = inlined_call_operand.hbm [shape: f32[32,96], index: 1, kind: input, shape index: {}]
  %s2 = inlined_call_operand.vmem [shape: f32[1,96], index: 2, kind: input, shape index: {}]
  %s3 = inlined_call_operand.hbm [shape: f32[16,96], index: 3, kind: output, shape index: {}]
  %s4 = sld [smem:[#allocation0]]
  $region38: #{tpu_custom_call.1} parent=0
    _
  %s6 = ssub.s32 1, %s4
  %s7 = scalar_select 0, %s6, %s4
  $region1: #{tpu_custom_call.1} parent=0
    #allocation3 [shape = 'u8[8192]{0}', space=vmem, size = 0x2000, scoped, tag = 'input window, operand 0, single buffered']
    #allocation4 [shape = 's32[1]{0}', space=sflag, size = 0x4, scoped, tag = 'scoped memory for tpu_custom_call.1']
    #allocation5 [shape = 's32[1]{0}', space=sflag, size = 0x4, scoped, tag = 'scoped memory for tpu_custom_call.1']
    #allocation6 [shape = 'u8[16384]{0}', space=vmem, size = 0x4000, scoped, tag = 'input window, operand 1, single buffered']
    #allocation7 [shape = 's32[1]{0}', space=sflag, size = 0x4, scoped, tag = 'scoped memory for tpu_custom_call.1']
    #allocation8 [shape = 'u8[8192]{0}', space=vmem, size = 0x2000, scoped, tag = 'output window, operand 0, single buffered']
    %8 = vsyncpa [#allocation4], 0
    %9 = vsyncpa [#allocation7], 0
    %10 = vsyncpa [#allocation5], 0
    // Predicated region
    $region2: #{tpu_custom_call.1} parent=1 // pred_check
      _
    $region3: #{tpu_custom_call.1} parent=1 // pred_check_branch
      %12 = sbr.rel (0) target = $region5
    $region4: #{tpu_custom_call.1} parent=1 // pred_region
      %s14 = ssub.s32 256, 256
      %15 = vsyncadd [#allocation4], %s14
      %s16 = sshll.u32 [#allocation3], 4
      %s17 = int_to_ptr.vmem [resolvable:$true] %s16
      %22 = dma.hbm_to_vmem [thread:$0]  %s0, 256, %s17, [#allocation4], 128, 128, 8
    $region5: #{tpu_custom_call.1} parent=1 // pred_fallthru
      _
    // Predicated region
    $region6: #{tpu_custom_call.1} parent=1 // pred_check
      _
    $region7: #{tpu_custom_call.1} parent=1 // pred_check_branch
      %24 = sbr.rel (0) target = $region9
    $region8: #{tpu_custom_call.1} parent=1 // pred_region
      %s26 = ssub.s32 512, 512
      %27 = vsyncadd [#allocation7], %s26
      %s28 = sshll.u32 [#allocation6], 4
      %s29 = int_to_ptr.vmem [resolvable:$true] %s28
      %34 = dma.hbm_to_vmem [thread:$0]  %s1, 512, %s29, [#allocation7], 128, 128, 8
    $region9: #{tpu_custom_call.1} parent=1 // pred_fallthru
      _
    // Predicated region
    $region10: #{tpu_custom_call.1} parent=1 // pred_check
      _
    $region11: #{tpu_custom_call.1} parent=1 // pred_check_branch
      %36 = sbr.rel (0) target = $region13
    $region12: #{tpu_custom_call.1} parent=1 // pred_region
      _
    $region13: #{tpu_custom_call.1} parent=1 // pred_fallthru
      _
    // Predicated region
    $region14: #{tpu_custom_call.1} parent=1 // pred_check
      _
    $region15: #{tpu_custom_call.1} parent=1 // pred_check_branch
      %38 = sbr.rel (0) target = $region17
    $region16: #{tpu_custom_call.1} parent=1 // pred_region
      %39 = dma.done [#allocation4], 256
    $region17: #{tpu_custom_call.1} parent=1 // pred_fallthru
      _
    // Predicated region
    $region18: #{tpu_custom_call.1} parent=1 // pred_check
      _
    $region19: #{tpu_custom_call.1} parent=1 // pred_check_branch
      %41 = sbr.rel (0) target = $region21
    $region20: #{tpu_custom_call.1} parent=1 // pred_region
      %42 = dma.done [#allocation7], 512
    $region21: #{tpu_custom_call.1} parent=1 // pred_fallthru
      _
    %p43 = scmp.eq.s32.totalorder 0, 0
    // Predicated region
    $region22: #{tpu_custom_call.1} parent=1 // pred_check
      %p44 = pneg %p43
    $region23: #{tpu_custom_call.1} parent=1 // pred_check_branch
      %46 = sbr.rel (%p44) target = $region25
    $region24: #{tpu_custom_call.1} parent=1 // pred_region
      %vm47 = vcmask 785408
      %48 = vst.msk [vmem:[#allocation2] sm:$0xff] %vm47, 0.0
      %49 = vst.msk [vmem:[#allocation2 + $0x8] sm:$0xff] %vm47, 0.0
    $region25: #{tpu_custom_call.1} parent=1 // pred_fallthru
      _
    %v50 = vld [vmem:[#allocation2] sm:$0xff]
    %v51 = vld [vmem:[#allocation2 + $0x8] sm:$0xff]
    %v52 = vld [vmem:[#allocation3] sm:$0xff]
    %v53 = vld [vmem:[#allocation3 + $0x8] sm:$0xff]
    %v54 = vld [vmem:[#allocation6] sm:$0xff]
    %v55 = vld [vmem:[#allocation6 + $0x8] sm:$0xff]
    %v56 = vld [vmem:[#allocation6 + $0x10] sm:$0xff]
    %v57 = vld [vmem:[#allocation6 + $0x18] sm:$0xff]
    %vm58 = vcmask 261120
    %v60 = vsel %vm58, %v52, 0
    %v63 = vsel %vm58, %v53, 0
    %65 = vmatprep.subr.mxu0 0.0
    %66 = vmatpush1.msra.mxu0 0.0
    %67 = vmatprep.subr.mxu0 0.0
    %68 = vmatpush1.msra.mxu0 0.0
    %69 = vmatprep.subr.mxu0 0.0
    %70 = vmatpush1.msra.mxu0 0.0
    %71 = vmatprep.subr.mxu0 0.0
    %72 = vmatpush1.msra.mxu0 0.0
    %73 = vmatprep.subr.mxu0 0.0
    %74 = vmatpush1.msra.mxu0 0.0
    %75 = vmatprep.subr.mxu0 0.0
    %76 = vmatpush1.msra.mxu0 0.0
    %77 = vmatprep.subr.mxu0 0.0
    %78 = vmatpush1.msra.mxu0 0.0
    %79 = vmatprep.subr.mxu0 0.0
    %80 = vmatpush1.msra.mxu0 0.0
    %81 = vmatprep.subr.mxu0 0.0
    %82 = vmatpush1.msra.mxu0 0.0
    %83 = vmatprep.subr.mxu0 0.0
    %84 = vmatpush1.msra.mxu0 0.0
    %85 = vmatprep.subr.mxu0 0.0
    %86 = vmatpush1.msra.mxu0 0.0
    %87 = vmatprep.subr.mxu0 0.0
    %88 = vmatpush1.msra.mxu0 0.0
    %89 = vmatprep.subr.mxu0 0.0
    %90 = vmatpush1.msra.mxu0 %v57
    %91 = vmatprep.subr.mxu0 0.0
    %92 = vmatpush1.msra.mxu0 %v56
    %93 = vmatprep.subr.mxu0 0.0
    %94 = vmatpush1.msra.mxu0 %v55
    %95 = vmatprep.subr.mxu0 0.0
    %96 = vmatpush1.msra.mxu0 %v54
    %97 = vmatprep.subr.mxu0 0.0
    %98 = vmatpush2.msra.mxu0 0.0
    %99 = vmatprep.subr.mxu0 0.0
    %100 = vmatpush2.msra.mxu0 0.0
    %101 = vmatprep.subr.mxu0 0.0
    %102 = vmatpush2.msra.mxu0 0.0
    %103 = vmatprep.subr.mxu0 0.0
    %104 = vmatpush2.msra.mxu0 0.0
    %105 = vmatprep.subr.mxu0 0.0
    %106 = vmatpush2.msra.mxu0 0.0
    %107 = vmatprep.subr.mxu0 0.0
    %108 = vmatpush2.msra.mxu0 0.0
    %109 = vmatprep.subr.mxu0 0.0
    %110 = vmatpush2.msra.mxu0 0.0
    %111 = vmatprep.subr.mxu0 0.0
    %112 = vmatpush2.msra.mxu0 0.0
    %113 = vmatprep.subr.mxu0 0.0
    %114 = vmatpush2.msra.mxu0 0.0
    %115 = vmatprep.subr.mxu0 0.0
    %116 = vmatpush2.msra.mxu0 0.0
    %117 = vmatprep.subr.mxu0 0.0
    %118 = vmatpush2.msra.mxu0 0.0
    %119 = vmatprep.subr.mxu0 0.0
    %120 = vmatpush2.msra.mxu0 0.0
    %121 = vmatprep.subr.mxu0 0.0
    %122 = vmatpush2.msra.mxu0 0.0
    %123 = vmatprep.subr.mxu0 0.0
    %124 = vmatpush2.msra.mxu0 0.0
    %125 = vmatprep.subr.mxu0 0.0
    %126 = vmatpush2.msra.mxu0 0.0
    %127 = vmatprep.subr.mxu0 0.0
    %128 = vmatpush2.msra.mxu0 0.0
    %129 = vmatprep.mubr.f32.mxu0 0.0
    %130 = vmatmul.mubr.f32.gmra.mxu0 %v60
    %v131 = vpop.f32.mrf.mxu0
    %v132 = vadd.f32 0.0, %v131
    %v133 = vpop.f32.mrf.mxu0
    %134 = vmatprep.mubr.f32.mxu0 0.0
    %135 = vmatmul.mubr.f32.gmra.mxu0 %v63
    %v136 = vpop.f32.mrf.mxu0
    %v137 = vadd.f32 0.0, %v136
    %v138 = vpop.f32.mrf.mxu0
    %139 = vdwg.mxu0
    %v140 = vadd.f32 %v50, %v132
    %v141 = vadd.f32 %v51, %v137
    %vm142 = vcmask 785408
    %143 = vst.msk [vmem:[#allocation2] sm:$0xff] %vm142, %v140
    %144 = vst.msk [vmem:[#allocation2 + $0x8] sm:$0xff] %vm142, %v141
    // Predicated region
    $region26: #{tpu_custom_call.1} parent=1 // pred_check
      %p145 = pneg %p43
    $region27: #{tpu_custom_call.1} parent=1 // pred_check_branch
      %147 = sbr.rel (%p145) target = $region29
    $region28: #{tpu_custom_call.1} parent=1 // pred_region
      %v148 = vld [vmem:[#allocation2] sm:$0xff]
      %v149 = vld [vmem:[#allocation2 + $0x8] sm:$0xff]
      %v150 = vld [vmem:[%s2] sm:$0x1]
      %v152 = vlaneseq
      %v153 = vshrl.u32 %v152, 7
      %v154 = vsub.s32 0, %v153
      %v155 = vrot.slane %v150, %v154
      %v157 = vadd.f32 %v148, %v155
      %v158 = vadd.f32 %v149, %v155
      %159 = vst.msk [vmem:[#allocation8] sm:$0xff] %vm142, %v157
      %160 = vst.msk [vmem:[#allocation8 + $0x8] sm:$0xff] %vm142, %v158
    $region29: #{tpu_custom_call.1} parent=1 // pred_fallthru
      _
    // Predicated region
    $region30: #{tpu_custom_call.1} parent=1 // pred_check
      _
    $region31: #{tpu_custom_call.1} parent=1 // pred_check_branch
      %162 = sbr.rel (0) target = $region33
    $region32: #{tpu_custom_call.1} parent=1 // pred_region
      %s164 = ssub.s32 256, 256
      %165 = vsyncadd [#allocation5], %s164
      %s166 = sshll.u32 [#allocation8], 4
      %s167 = int_to_ptr.vmem [resolvable:$true] %s166
      %172 = dma.vmem_to_hbm [thread:$0]  %s167, 256, %s3, [#allocation5], 128, 128, 8
    $region33: #{tpu_custom_call.1} parent=1 // pred_fallthru
      _
    // Predicated region
    $region34: #{tpu_custom_call.1} parent=1 // pred_check
      _
    $region35: #{tpu_custom_call.1} parent=1 // pred_check_branch
      %174 = sbr.rel (0) target = $region37
    $region36: #{tpu_custom_call.1} parent=1 // pred_region
      %175 = dma.done [#allocation5], 256
    $region37: #{tpu_custom_call.1} parent=1 // pred_fallthru
      _
    %176 = vsyncpa [#allocation4], 1
    %177 = vsyncpa [#allocation7], 1
    %178 = vsyncpa [#allocation5], 1

</llo_original>
